<compile_context>
chip_gen: v7x
topology: tpu7x:2x2x1
jax: 0.10.0
libtpu: 0.0.40
codegen_flags: <defaults>
</compile_context>

<pallas_src>
import numpy as np
import jax
import jax.numpy as jnp
from jax.experimental import pallas as pl
from jax.experimental.pallas import tpu as pltpu

NUM_CLASSES = 8
IN_CHANNELS = 32
MODALITIES = ("rgb", "depth")
AVG_POOL_KERNEL = (1, 7, 7)


def _round_up(x, m):
    return ((x + m - 1) // m) * m


def _make_fused_kernel(num_modalities, multi_tile):
    """Build a kernel body handling `num_modalities` (x, w, b, out) sets.

    Ref layout (in order):
      x_0..x_{M-1}   : (1, c_t, L*HW)   lane-dense feature block
      wsp            : (L*HW, Lo)       fused pool+mean weight matrix
      w_0..w_{M-1}   : (nC, c_t)        1x1x1 Conv3d weight tile
      b_0..b_{M-1}   : (nC, 1)          Conv3d bias
      o_0..o_{M-1}   : (1, nC, Lo)      logits (PyTorch layout)
      [acc_0..acc_{M-1} : (nC, Lo) f32  only when multi_tile]
    """
    M = num_modalities

    if multi_tile:
        def kernel(*refs):
            x_refs = refs[0:M]
            wsp_ref = refs[M]
            wt_refs = refs[M + 1:2 * M + 1]
            b_refs = refs[2 * M + 1:3 * M + 1]
            o_refs = refs[3 * M + 1:4 * M + 1]
            acc_refs = refs[4 * M + 1:5 * M + 1]
            c = pl.program_id(1)

            @pl.when(c == 0)
            def _init():
                for m in range(M):
                    acc_refs[m][...] = jnp.zeros_like(acc_refs[m])

            wsp = wsp_ref[...]                                    # (L*HW, Lo)
            for m in range(M):
                x = x_refs[m][0]                                  # (c_t, L*HW)
                # AvgPool3d + mean(3).mean(3)  ==  x @ Wsp  (exact algebra)
                pooled = jnp.dot(x, wsp,
                                 preferred_element_type=jnp.float32)  # (c_t, Lo)
                # 1x1x1 Conv3d == channel matmul on the MXU, output already in
                # the final (nC, Lo) layout.
                acc_refs[m][...] += jnp.dot(wt_refs[m][...], pooled,
                                            preferred_element_type=jnp.float32)

            @pl.when(c == pl.num_programs(1) - 1)
            def _finalize():
                for m in range(M):
                    o_refs[m][0] = (acc_refs[m][...]
                                    + b_refs[m][...]).astype(o_refs[m].dtype)
        return kernel

    def kernel(*refs):
        # Single channel tile: no accumulator, no predicated branches.
        x_refs = refs[0:M]
        wsp_ref = refs[M]
        wt_refs = refs[M + 1:2 * M + 1]
        b_refs = refs[2 * M + 1:3 * M + 1]
        o_refs = refs[3 * M + 1:4 * M + 1]

        wsp = wsp_ref[...]
        for m in range(M):
            pooled = jnp.dot(x_refs[m][0], wsp,
                             preferred_element_type=jnp.float32)
            logits = jnp.dot(wt_refs[m][...], pooled,
                             preferred_element_type=jnp.float32) + b_refs[m][...]
            o_refs[m][0] = logits.astype(o_refs[m].dtype)
    return kernel


def _pool_mean_weight_matrix(L, H, W, kt, kh, kw):
    """Block-diagonal matrix Wsp (L*H*W, Lo) s.t. for x2d of shape (C, L*H*W):
         x2d @ Wsp == mean_{h,w}( AvgPool3d((kt,kh,kw), stride 1)(x) )
    Mathematically identical to pool-then-mean (window-count weights)."""
    Lo, Ho, Wo = L - kt + 1, H - kh + 1, W - kw + 1
    counts = np.zeros((H, W), np.float64)
    for i in range(Ho):
        for j in range(Wo):
            counts[i:i + kh, j:j + kw] += 1.0
    sp = (counts / float(kt * kh * kw * Ho * Wo)).reshape(-1)    # (H*W,)
    wsp = np.zeros((L, H * W, Lo), np.float64)
    for lo in range(Lo):
        wsp[lo:lo + kt, :, lo] = sp[None, :]
    return jnp.asarray(wsp.reshape(L * H * W, Lo), dtype=jnp.float32)


def _choose_channel_tile(C, per_channel_padded_bytes, num_modalities,
                         x_vmem_budget_bytes):
    """Pick a channel tile that (a) divides C, (b) is a multiple of 128 (lane
    rule for the (nC, c_t) conv-weight block) or equals C, and (c) keeps the
    total padded, double-buffered x footprint of ALL modalities inside the
    budget.  Bigger tiles are preferred (HBM-bound head, ~0.35 us/step)."""
    per_c = 2 * num_modalities * per_channel_padded_bytes        # 2x = dbl-buf
    if C * per_c <= x_vmem_budget_bytes or C % 128 != 0:
        # Whole channel range in one block.  Also the only legal choice when C
        # is not a multiple of 128.
        return C
    candidates = [m * 128 for m in range(C // 128, 0, -1) if C % (m * 128) == 0]
    for c_t in candidates:
        if c_t * per_c <= x_vmem_budget_bytes:
            return c_t
    return candidates[-1]   # best effort: smallest legal 128-multiple divisor


def multimodal_ssa_head_forward(x_list, conv_weights, conv_biases,
                                avg_pool_kernel=AVG_POOL_KERNEL,
                                channel_tile=None,
                                x_vmem_budget_bytes=32 << 20,
                                vmem_limit_bytes=48 << 20):
    """Fused forward for all modalities in ONE pallas_call.

    x_list: list of (N, C, L, H, W) arrays (one per modality, shared shape).
    conv_weights: list of (nC, C, 1, 1, 1); conv_biases: list of (nC,).
    Returns list of (N, nC, Lo) logits matching the PyTorch forward."""
    M = len(x_list)
    N, C, L, H, W = x_list[0].shape
    for x in x_list:
        assert x.shape == (N, C, L, H, W), "modalities must share shape"
    kt, kh, kw = avg_pool_kernel
    Lo = L - kt + 1
    nC = conv_weights[0].shape[0]
    LHW = L * H * W
    out_dtype = x_list[0].dtype

    # Lane-dense layout: merge trailing (L, H, W) -> one minor axis (free op).
    xs = [x.reshape(N, C, LHW) for x in x_list]
    wts = [w.reshape(nC, C) for w in conv_weights]
    bs = [b.reshape(nC, 1).astype(jnp.float32) for b in conv_biases]
    wsp = _pool_mean_weight_matrix(L, H, W, kt, kh, kw)

    itemsize = xs[0].dtype.itemsize
    per_c_pad = _round_up(LHW, 128) * itemsize   # padded bytes per channel row
    if channel_tile is None:
        c_t = _choose_channel_tile(C, per_c_pad, M, x_vmem_budget_bytes)
    else:
        c_t = channel_tile
        assert C % c_t == 0 and (c_t == C or c_t % 128 == 0), "illegal tile"
    n_ctiles = C // c_t
    multi_tile = n_ctiles > 1

    if multi_tile:
        grid = (N, n_ctiles)
        x_spec = pl.BlockSpec((1, c_t, LHW), lambda n, c: (n, c, 0))
        wsp_spec = pl.BlockSpec((LHW, Lo), lambda n, c: (0, 0))
        wt_spec = pl.BlockSpec((nC, c_t), lambda n, c: (0, c))
        b_spec = pl.BlockSpec((nC, 1), lambda n, c: (0, 0))
        o_spec = pl.BlockSpec((1, nC, Lo), lambda n, c: (n, 0, 0))
        scratch = [pltpu.VMEM((nC, Lo), jnp.float32) for _ in range(M)]
        semantics = ("parallel", "arbitrary")
    else:
        grid = (N,)
        x_spec = pl.BlockSpec((1, C, LHW), lambda n: (n, 0, 0))
        wsp_spec = pl.BlockSpec((LHW, Lo), lambda n: (0, 0))
        wt_spec = pl.BlockSpec((nC, C), lambda n: (0, 0))
        b_spec = pl.BlockSpec((nC, 1), lambda n: (0, 0))
        o_spec = pl.BlockSpec((1, nC, Lo), lambda n: (n, 0, 0))
        scratch = []
        semantics = ("parallel",)

    kernel = _make_fused_kernel(M, multi_tile)

    # Advisory cost: bandwidth-only custom call (reads x once, tiny matmuls).
    bytes_accessed = (sum(int(np.prod(x.shape)) * x.dtype.itemsize for x in xs)
                      + sum(int(np.prod(w.shape)) * w.dtype.itemsize for w in wts)
                      + int(wsp.size) * 4 + M * nC * 4
                      + M * N * nC * Lo * jnp.dtype(out_dtype).itemsize)
    flops = M * (2 * N * C * LHW * Lo + 2 * N * nC * C * Lo)
    cost = pl.CostEstimate(flops=flops, transcendentals=0,
                           bytes_accessed=bytes_accessed)

    outs = pl.pallas_call(
        kernel,
        out_shape=tuple(jax.ShapeDtypeStruct((N, nC, Lo), out_dtype)
                        for _ in range(M)),
        grid=grid,
        in_specs=([x_spec] * M + [wsp_spec] + [wt_spec] * M + [b_spec] * M),
        out_specs=tuple(o_spec for _ in range(M)),
        scratch_shapes=scratch,
        compiler_params=pltpu.CompilerParams(
            dimension_semantics=semantics,
            vmem_limit_bytes=vmem_limit_bytes),
        cost_estimate=cost,
    )(*xs, wsp, *wts, *bs)
    return list(outs)


def reference_forward(x_list, conv_weights, conv_biases,
                      avg_pool_kernel=AVG_POOL_KERNEL):
    """Pure-JAX reference mirroring the PyTorch ops literally."""
    kt, kh, kw = avg_pool_kernel
    outs = []
    for x, w, b in zip(x_list, conv_weights, conv_biases):
        pooled = jax.lax.reduce_window(
            x, 0.0, jax.lax.add,
            window_dimensions=(1, 1, kt, kh, kw),
            window_strides=(1, 1, 1, 1, 1),
            padding="VALID") / float(kt * kh * kw)
        # Dropout(p=0) == identity
        w2 = w.reshape(w.shape[0], w.shape[1])                   # (nC, C)
        out = jnp.einsum("ncluv,kc->nkluv", pooled, w2) \
            + b[None, :, None, None, None]
        outs.append(out.mean(axis=3).mean(axis=3))               # (N, nC, Lo)
    return outs


def _make_inputs(key, M, N, C, L, H, W, nC):
    keys = jax.random.split(key, 3 * M)
    x_list, conv_weights, conv_biases = [], [], []
    for m in range(M):
        x_list.append(jax.random.normal(keys[3 * m], (N, C, L, H, W),
                                        dtype=jnp.float32))
        conv_weights.append(0.05 * jax.random.normal(
            keys[3 * m + 1], (nC, C, 1, 1, 1), dtype=jnp.float32))
        conv_biases.append(0.1 * jax.random.normal(
            keys[3 * m + 2], (nC,), dtype=jnp.float32))
    return x_list, conv_weights, conv_biases


if __name__ == "__main__":
    M = len(MODALITIES)
    nC = NUM_CLASSES
    key = jax.random.PRNGKey(0)
    k1, k2 = jax.random.split(key)

    # --- Test 1: default path (whole channel range in one block, grid=(N,)) ---
    N, C, L, H, W = 2, IN_CHANNELS, 4, 12, 12
    x_list, conv_w, conv_b = _make_inputs(k1, M, N, C, L, H, W, nC)
    logits = multimodal_ssa_head_forward(x_list, conv_w, conv_b)
    logits = jax.block_until_ready(logits)
    ref = reference_forward(x_list, conv_w, conv_b)
    for got, want in zip(logits, ref):
        assert got.shape == (N, nC, L), got.shape
        np.testing.assert_allclose(np.asarray(got), np.asarray(want),
                                   rtol=1e-4, atol=1e-4)

    # --- Test 2: channel-tiled accumulator path (grid=(N, C/c_t)) ---
    N2, C2 = 2, 256
    x_list2, conv_w2, conv_b2 = _make_inputs(k2, M, N2, C2, L, H, W, nC)
    logits2 = multimodal_ssa_head_forward(x_list2, conv_w2, conv_b2,
                                          channel_tile=128)
    logits2 = jax.block_until_ready(logits2)
    ref2 = reference_forward(x_list2, conv_w2, conv_b2)
    for got, want in zip(logits2, ref2):
        assert got.shape == (N2, nC, L), got.shape
        np.testing.assert_allclose(np.asarray(got), np.asarray(want),
                                   rtol=1e-4, atol=1e-4)

    # TODO(synk): get_loss / get_accuracy (CrossEntropy + SSA correlation loss)
    # are training utilities, not part of forward(), and are not implemented.
    print("KERNEL_OK")
</pallas_src>

<mosaic_0001>
module attributes {stable_mosaic.version = 11 : i64} {
  func.func @kernel(%arg0: i32, %arg1: memref<1x32x576xf32, #tpu.memory_space<vmem>>, %arg2: memref<1x32x576xf32, #tpu.memory_space<vmem>>, %arg3: memref<576x4xf32, #tpu.memory_space<vmem>>, %arg4: memref<8x32xf32, #tpu.memory_space<vmem>>, %arg5: memref<8x32xf32, #tpu.memory_space<vmem>>, %arg6: memref<8x1xf32, #tpu.memory_space<vmem>>, %arg7: memref<8x1xf32, #tpu.memory_space<vmem>>, %arg8: memref<1x8x4xf32, #tpu.memory_space<vmem>>, %arg9: memref<1x8x4xf32, #tpu.memory_space<vmem>>) attributes {dimension_semantics = [#tpu.dimension_semantics<parallel>], iteration_bounds = array<i64: 2>, scalar_prefetch = 0 : i64, scratch_operands = 0 : i64, tpu.core_type = #tpu.core_type<tc>, window_params = [{transform_indices = @transform_0, window_bounds = array<i64: 1, 32, 576>}, {transform_indices = @transform_1, window_bounds = array<i64: 1, 32, 576>}, {pipeline_mode = #tpu.pipeline_mode<synchronous>, transform_indices = @transform_2, window_bounds = array<i64: 576, 4>}, {pipeline_mode = #tpu.pipeline_mode<synchronous>, transform_indices = @transform_3, window_bounds = array<i64: 8, 32>}, {pipeline_mode = #tpu.pipeline_mode<synchronous>, transform_indices = @transform_4, window_bounds = array<i64: 8, 32>}, {pipeline_mode = #tpu.pipeline_mode<synchronous>, transform_indices = @transform_5, window_bounds = array<i64: 8, 1>}, {pipeline_mode = #tpu.pipeline_mode<synchronous>, transform_indices = @transform_6, window_bounds = array<i64: 8, 1>}, {transform_indices = @transform_7, window_bounds = array<i64: 1, 8, 4>}, {transform_indices = @transform_8, window_bounds = array<i64: 1, 8, 4>}]} {
    %c0 = arith.constant 0 : index
    %c0_0 = arith.constant 0 : index
    %0 = vector.load %arg3[%c0, %c0_0] : memref<576x4xf32, #tpu.memory_space<vmem>>, vector<576x4xf32>
    %c0_1 = arith.constant 0 : index
    %c0_2 = arith.constant 0 : index
    %c0_3 = arith.constant 0 : index
    %1 = vector.load %arg1[%c0_1, %c0_2, %c0_3] : memref<1x32x576xf32, #tpu.memory_space<vmem>>, vector<1x32x576xf32>
    %2 = vector.shape_cast %1 : vector<1x32x576xf32> to vector<32x576xf32>
    %cst = arith.constant dense<0.000000e+00> : vector<32x4xf32>
    %3 = tpu.matmul %2, %0, %cst {dimension_numbers = #tpu.dot_dimension_numbers<[1], [0], [0], [1], [0, 0, 1, 1], [], []>} : vector<32x576xf32>, vector<576x4xf32>, vector<32x4xf32> -> vector<32x4xf32>
    %c0_4 = arith.constant 0 : index
    %c0_5 = arith.constant 0 : index
    %4 = vector.load %arg4[%c0_4, %c0_5] : memref<8x32xf32, #tpu.memory_space<vmem>>, vector<8x32xf32>
    %cst_6 = arith.constant dense<0.000000e+00> : vector<8x4xf32>
    %5 = tpu.matmul %4, %3, %cst_6 {dimension_numbers = #tpu.dot_dimension_numbers<[1], [0], [0], [1], [0, 0, 1, 1], [], []>} : vector<8x32xf32>, vector<32x4xf32>, vector<8x4xf32> -> vector<8x4xf32>
    %c0_7 = arith.constant 0 : index
    %c0_8 = arith.constant 0 : index
    %6 = vector.load %arg6[%c0_7, %c0_8] : memref<8x1xf32, #tpu.memory_space<vmem>>, vector<8x1xf32>
    %7 = vector.broadcast %6 : vector<8x1xf32> to vector<8x4xf32>
    %8 = arith.addf %5, %7 : vector<8x4xf32>
    %c0_9 = arith.constant 0 : index
    %c0_10 = arith.constant 0 : index
    %c0_11 = arith.constant 0 : index
    %9 = vector.load %arg8[%c0_9, %c0_10, %c0_11] : memref<1x8x4xf32, #tpu.memory_space<vmem>>, vector<1x8x4xf32>
    %10 = vector.shape_cast %9 : vector<1x8x4xf32> to vector<8x4xf32>
    %11 = vector.shape_cast %8 : vector<8x4xf32> to vector<1x8x4xf32>
    tpu.vector_store %arg8[%c0_9, %c0_10, %c0_11], %11 {strides = array<i32>} : memref<1x8x4xf32, #tpu.memory_space<vmem>>, vector<1x8x4xf32>,
    %c0_12 = arith.constant 0 : index
    %c0_13 = arith.constant 0 : index
    %c0_14 = arith.constant 0 : index
    %12 = vector.load %arg2[%c0_12, %c0_13, %c0_14] : memref<1x32x576xf32, #tpu.memory_space<vmem>>, vector<1x32x576xf32>
    %13 = vector.shape_cast %12 : vector<1x32x576xf32> to vector<32x576xf32>
    %cst_15 = arith.constant dense<0.000000e+00> : vector<32x4xf32>
    %14 = tpu.matmul %13, %0, %cst_15 {dimension_numbers = #tpu.dot_dimension_numbers<[1], [0], [0], [1], [0, 0, 1, 1], [], []>} : vector<32x576xf32>, vector<576x4xf32>, vector<32x4xf32> -> vector<32x4xf32>
    %c0_16 = arith.constant 0 : index
    %c0_17 = arith.constant 0 : index
    %15 = vector.load %arg5[%c0_16, %c0_17] : memref<8x32xf32, #tpu.memory_space<vmem>>, vector<8x32xf32>
    %cst_18 = arith.constant dense<0.000000e+00> : vector<8x4xf32>
    %16 = tpu.matmul %15, %14, %cst_18 {dimension_numbers = #tpu.dot_dimension_numbers<[1], [0], [0], [1], [0, 0, 1, 1], [], []>} : vector<8x32xf32>, vector<32x4xf32>, vector<8x4xf32> -> vector<8x4xf32>
    %c0_19 = arith.constant 0 : index
    %c0_20 = arith.constant 0 : index
    %17 = vector.load %arg7[%c0_19, %c0_20] : memref<8x1xf32, #tpu.memory_space<vmem>>, vector<8x1xf32>
    %18 = vector.broadcast %17 : vector<8x1xf32> to vector<8x4xf32>
    %19 = arith.addf %16, %18 : vector<8x4xf32>
    %c0_21 = arith.constant 0 : index
    %c0_22 = arith.constant 0 : index
    %c0_23 = arith.constant 0 : index
    %20 = vector.load %arg9[%c0_21, %c0_22, %c0_23] : memref<1x8x4xf32, #tpu.memory_space<vmem>>, vector<1x8x4xf32>
    %21 = vector.shape_cast %20 : vector<1x8x4xf32> to vector<8x4xf32>
    %22 = vector.shape_cast %19 : vector<8x4xf32> to vector<1x8x4xf32>
    tpu.vector_store %arg9[%c0_21, %c0_22, %c0_23], %22 {strides = array<i32>} : memref<1x8x4xf32, #tpu.memory_space<vmem>>, vector<1x8x4xf32>,
    return
  }
  func.func @transform_0(%arg0: i32) -> (i32, i32, i32) {
    %c0_i32 = arith.constant 0 : i32
    %c0_i32_0 = arith.constant 0 : i32
    %c0_i32_1 = arith.constant 0 : i32
    return %arg0, %c0_i32, %c0_i32_0 : i32, i32, i32
  }
  func.func @transform_1(%arg0: i32) -> (i32, i32, i32) {
    %c0_i32 = arith.constant 0 : i32
    %c0_i32_0 = arith.constant 0 : i32
    %c0_i32_1 = arith.constant 0 : i32
    return %arg0, %c0_i32, %c0_i32_0 : i32, i32, i32
  }
  func.func @transform_2(%arg0: i32) -> (i32, i32) {
    %c0_i32 = arith.constant 0 : i32
    %c0_i32_0 = arith.constant 0 : i32
    %c0_i32_1 = arith.constant 0 : i32
    return %c0_i32, %c0_i32_0 : i32, i32
  }
  func.func @transform_3(%arg0: i32) -> (i32, i32) {
    %c0_i32 = arith.constant 0 : i32
    %c0_i32_0 = arith.constant 0 : i32
    %c0_i32_1 = arith.constant 0 : i32
    return %c0_i32, %c0_i32_0 : i32, i32
  }
  func.func @transform_4(%arg0: i32) -> (i32, i32) {
    %c0_i32 = arith.constant 0 : i32
    %c0_i32_0 = arith.constant 0 : i32
    %c0_i32_1 = arith.constant 0 : i32
    return %c0_i32, %c0_i32_0 : i32, i32
  }
  func.func @transform_5(%arg0: i32) -> (i32, i32) {
    %c0_i32 = arith.constant 0 : i32
    %c0_i32_0 = arith.constant 0 : i32
    %c0_i32_1 = arith.constant 0 : i32
    return %c0_i32, %c0_i32_0 : i32, i32
  }
  func.func @transform_6(%arg0: i32) -> (i32, i32) {
    %c0_i32 = arith.constant 0 : i32
    %c0_i32_0 = arith.constant 0 : i32
    %c0_i32_1 = arith.constant 0 : i32
    return %c0_i32, %c0_i32_0 : i32, i32
  }
  func.func @transform_7(%arg0: i32) -> (i32, i32, i32) {
    %c0_i32 = arith.constant 0 : i32
    %c0_i32_0 = arith.constant 0 : i32
    %c0_i32_1 = arith.constant 0 : i32
    return %arg0, %c0_i32, %c0_i32_0 : i32, i32, i32
  }
  func.func @transform_8(%arg0: i32) -> (i32, i32, i32) {
    %c0_i32 = arith.constant 0 : i32
    %c0_i32_0 = arith.constant 0 : i32
    %c0_i32_1 = arith.constant 0 : i32
    return %arg0, %c0_i32, %c0_i32_0 : i32, i32, i32
  }
}

</mosaic_0001>

<llo_original>
// kernel: tpu_custom_call.1
$region0: #{tpu_custom_call.1}
  #allocation0 [shape = 'u32[]', space=smem, size = 0x4, offset = 0x4, fixed_abs, tag = 'smem constant byte address 0x4 - core index']
  #allocation1 [shape = 'u32[144,128]{1,0:T(1,128)}', space=vmem, size = 0x12000, scoped, tag = 'internal scratch']
  %s0 = inlined_call_operand.vmem [shape: f32[2,32,576], index: 0, kind: input, shape index: {}]
  %s1 = inlined_call_operand.hbm [shape: f32[2,32,576], index: 1, kind: input, shape index: {}]
  %s2 = inlined_call_operand.vmem [shape: f32[576,4], index: 2, kind: input, shape index: {}]
  %s3 = inlined_call_operand.vmem [shape: f32[8,32], index: 3, kind: input, shape index: {}]
  %s4 = inlined_call_operand.vmem [shape: f32[8,32], index: 4, kind: input, shape index: {}]
  %s5 = inlined_call_operand.vmem [shape: f32[8,1], index: 5, kind: input, shape index: {}]
  %s6 = inlined_call_operand.vmem [shape: f32[8,1], index: 6, kind: input, shape index: {}]
  %s7 = inlined_call_operand.vmem [shape: f32[2,8,4], index: 7, kind: output, shape index: {0}]
  %s8 = inlined_call_operand.vmem [shape: f32[2,8,4], index: 8, kind: output, shape index: {1}]
  %9 = xla_tuple %s7, %s8
  %s10 = sld [smem:[#allocation0]]
  $region73: #{tpu_custom_call.1} parent=0
    _
  %s12 = ssub.s32 1, %s10
  %s13 = scalar_select 0, %s12, %s10
  $region1: #{tpu_custom_call.1} parent=0
    #allocation2 [shape = 'u8[163840]{0}', space=vmem, size = 0x28000, scoped, tag = 'input window, operand 1']
    #allocation3 [shape = 's32[2]{0}', space=sflag, size = 0x8, scoped, tag = 'scoped memory for tpu_custom_call.1']
    %14 = vsyncpa [#allocation3], 0
    %s15 = scalar_lea.sflag [#allocation3], 1
    %16 = vsyncpa %s15, 0
    loop: start=0, step=1, limit=4
    $region2: #{tpu_custom_call.1} parent=1 // loop_pre_header
      _
    $region3: #{tpu_custom_call.1} parent=1 // loop_header
      %s18 = sphi 0, %s22
      %p19 = scmp.ge.s32.totalorder %s18, 4
      %s28 = sphi 0, %s30
      %s31 = sphi 0, %s28
      %s32 = sphi 0, %s31
      %s48 = sphi 0, %s32
      %s54 = sphi 0, %s56
      %s57 = sphi 0, %s54
      %s58 = sphi 0, %s57
      %s74 = sphi 0, %s58
      %s78 = sphi 0, %s78
      %s80 = sphi 0, %s78
      %s81 = sphi 0, %s80
      %s95 = sphi 0, %s81
      %s99 = sphi 0, %s99
      %s101 = sphi 0, %s99
      %s102 = sphi 0, %s101
      %s116 = sphi 0, %s102
      %s120 = sphi 0, %s120
      %s122 = sphi 0, %s120
      %s123 = sphi 0, %s122
      %s137 = sphi 0, %s123
      %s141 = sphi 0, %s141
      %s143 = sphi 0, %s141
      %s144 = sphi 0, %s143
      %s158 = sphi 0, %s144
      %s162 = sphi 0, %s162
      %s164 = sphi 0, %s162
      %s165 = sphi 0, %s164
      %s179 = sphi 0, %s165
      %s185 = sphi 0, %s187
      %s188 = sphi 0, %s185
      %s189 = sphi 0, %s188
      %s205 = sphi 0, %s189
      %s211 = sphi 0, %s213
      %s214 = sphi 0, %s211
      %s215 = sphi 0, %s214
      %s231 = sphi 0, %s215
    $region4: #{tpu_custom_call.1} parent=1 // loop_header_branch
      %21 = sbr.rel (%p19) target = $region8
    $region5: #{tpu_custom_call.1} parent=1 // loop_body
      %s23 = ssub.s32 %s18, 1
      %s24 = ssub.s32 %s18, 2
      %s25 = sadd.s32 %s18, 1
      %s26 = ssub.s32 %s18, %s25
      %p27 = scmp.eq.s32.totalorder %s26, 0
      %s29 = sadd.s32 %s28, 1
      %s30 = scalar_select %p27, %s28, %s29
      %p33 = pneg %p27
      %p34 = scmp.eq.s32.totalorder %s18, 1
      %p35 = por %p33, %p34
      %p36 = scmp.ne.s32.totalorder %s28, %s31
      %p37 = scmp.eq.s32.totalorder %s18, 0
      %p38 = por %p36, %p37
      %p39 = scmp.ne.s32.totalorder %s28, %s31
      %p40 = scmp.eq.s32.totalorder %s23, 1
      %p41 = por %p39, %p40
      %p42 = scmp.ne.s32.totalorder %s31, %s32
      %p43 = scmp.eq.s32.totalorder %s23, 0
      %p44 = por %p42, %p43
      %p45 = scmp.ne.s32.totalorder %s31, %s32
      %p46 = scmp.eq.s32.totalorder %s24, 1
      %p47 = por %p45, %p46
      %p49 = scmp.ne.s32.totalorder %s32, %s48
      %p50 = scmp.eq.s32.totalorder %s24, 0
      %p51 = por %p49, %p50
      %s52 = ssub.s32 %s18, %s25
      %p53 = scmp.eq.s32.totalorder %s52, 0
      %s55 = sadd.s32 %s54, 1
      %s56 = scalar_select %p53, %s54, %s55
      %p59 = pneg %p53
      %p60 = scmp.eq.s32.totalorder %s18, 1
      %p61 = por %p59, %p60
      %p62 = scmp.ne.s32.totalorder %s54, %s57
      %p63 = scmp.eq.s32.totalorder %s18, 0
      %p64 = por %p62, %p63
      %p65 = scmp.ne.s32.totalorder %s54, %s57
      %p66 = scmp.eq.s32.totalorder %s23, 1
      %p67 = por %p65, %p66
      %p68 = scmp.ne.s32.totalorder %s57, %s58
      %p69 = scmp.eq.s32.totalorder %s23, 0
      %p70 = por %p68, %p69
      %p71 = scmp.ne.s32.totalorder %s57, %s58
      %p72 = scmp.eq.s32.totalorder %s24, 1
      %p73 = por %p71, %p72
      %p75 = scmp.ne.s32.totalorder %s58, %s74
      %p76 = scmp.eq.s32.totalorder %s24, 0
      %p77 = por %p75, %p76
      %s79 = sadd.s32 %s78, 1
      %p82 = scmp.eq.s32.totalorder %s18, 1
      %p83 = scmp.ne.s32.totalorder %s78, %s80
      %p84 = scmp.eq.s32.totalorder %s18, 0
      %p85 = por %p83, %p84
      %p86 = scmp.ne.s32.totalorder %s78, %s80
      %p87 = scmp.eq.s32.totalorder %s23, 1
      %p88 = por %p86, %p87
      %p89 = scmp.ne.s32.totalorder %s80, %s81
      %p90 = scmp.eq.s32.totalorder %s23, 0
      %p91 = por %p89, %p90
      %p92 = scmp.ne.s32.totalorder %s80, %s81
      %p93 = scmp.eq.s32.totalorder %s24, 1
      %p94 = por %p92, %p93
      %p96 = scmp.ne.s32.totalorder %s81, %s95
      %p97 = scmp.eq.s32.totalorder %s24, 0
      %p98 = por %p96, %p97
      %s100 = sadd.s32 %s99, 1
      %p103 = scmp.eq.s32.totalorder %s18, 1
      %p104 = scmp.ne.s32.totalorder %s99, %s101
      %p105 = scmp.eq.s32.totalorder %s18, 0
      %p106 = por %p104, %p105
      %p107 = scmp.ne.s32.totalorder %s99, %s101
      %p108 = scmp.eq.s32.totalorder %s23, 1
      %p109 = por %p107, %p108
      %p110 = scmp.ne.s32.totalorder %s101, %s102
      %p111 = scmp.eq.s32.totalorder %s23, 0
      %p112 = por %p110, %p111
      %p113 = scmp.ne.s32.totalorder %s101, %s102
      %p114 = scmp.eq.s32.totalorder %s24, 1
      %p115 = por %p113, %p114
      %p117 = scmp.ne.s32.totalorder %s102, %s116
      %p118 = scmp.eq.s32.totalorder %s24, 0
      %p119 = por %p117, %p118
      %s121 = sadd.s32 %s120, 1
      %p124 = scmp.eq.s32.totalorder %s18, 1
      %p125 = scmp.ne.s32.totalorder %s120, %s122
      %p126 = scmp.eq.s32.totalorder %s18, 0
      %p127 = por %p125, %p126
      %p128 = scmp.ne.s32.totalorder %s120, %s122
      %p129 = scmp.eq.s32.totalorder %s23, 1
      %p130 = por %p128, %p129
      %p131 = scmp.ne.s32.totalorder %s122, %s123
      %p132 = scmp.eq.s32.totalorder %s23, 0
      %p133 = por %p131, %p132
      %p134 = scmp.ne.s32.totalorder %s122, %s123
      %p135 = scmp.eq.s32.totalorder %s24, 1
      %p136 = por %p134, %p135
      %p138 = scmp.ne.s32.totalorder %s123, %s137
      %p139 = scmp.eq.s32.totalorder %s24, 0
      %p140 = por %p138, %p139
      %s142 = sadd.s32 %s141, 1
      %p145 = scmp.eq.s32.totalorder %s18, 1
      %p146 = scmp.ne.s32.totalorder %s141, %s143
      %p147 = scmp.eq.s32.totalorder %s18, 0
      %p148 = por %p146, %p147
      %p149 = scmp.ne.s32.totalorder %s141, %s143
      %p150 = scmp.eq.s32.totalorder %s23, 1
      %p151 = por %p149, %p150
      %p152 = scmp.ne.s32.totalorder %s143, %s144
      %p153 = scmp.eq.s32.totalorder %s23, 0
      %p154 = por %p152, %p153
      %p155 = scmp.ne.s32.totalorder %s143, %s144
      %p156 = scmp.eq.s32.totalorder %s24, 1
      %p157 = por %p155, %p156
      %p159 = scmp.ne.s32.totalorder %s144, %s158
      %p160 = scmp.eq.s32.totalorder %s24, 0
      %p161 = por %p159, %p160
      %s163 = sadd.s32 %s162, 1
      %p166 = scmp.eq.s32.totalorder %s18, 1
      %p167 = scmp.ne.s32.totalorder %s162, %s164
      %p168 = scmp.eq.s32.totalorder %s18, 0
      %p169 = por %p167, %p168
      %p170 = scmp.ne.s32.totalorder %s162, %s164
      %p171 = scmp.eq.s32.totalorder %s23, 1
      %p172 = por %p170, %p171
      %p173 = scmp.ne.s32.totalorder %s164, %s165
      %p174 = scmp.eq.s32.totalorder %s23, 0
      %p175 = por %p173, %p174
      %p176 = scmp.ne.s32.totalorder %s164, %s165
      %p177 = scmp.eq.s32.totalorder %s24, 1
      %p178 = por %p176, %p177
      %p180 = scmp.ne.s32.totalorder %s165, %s179
      %p181 = scmp.eq.s32.totalorder %s24, 0
      %p182 = por %p180, %p181
      %s183 = ssub.s32 %s18, %s25
      %p184 = scmp.eq.s32.totalorder %s183, 0
      %s186 = sadd.s32 %s185, 1
      %s187 = scalar_select %p184, %s185, %s186
      %p190 = pneg %p184
      %p191 = scmp.eq.s32.totalorder %s18, 1
      %p192 = por %p190, %p191
      %p193 = scmp.ne.s32.totalorder %s185, %s188
      %p194 = scmp.eq.s32.totalorder %s18, 0
      %p195 = por %p193, %p194
      %p196 = scmp.ne.s32.totalorder %s185, %s188
      %p197 = scmp.eq.s32.totalorder %s23, 1
      %p198 = por %p196, %p197
      %p199 = scmp.ne.s32.totalorder %s188, %s189
      %p200 = scmp.eq.s32.totalorder %s23, 0
      %p201 = por %p199, %p200
      %p202 = scmp.ne.s32.totalorder %s188, %s189
      %p203 = scmp.eq.s32.totalorder %s24, 1
      %p204 = por %p202, %p203
      %p206 = scmp.ne.s32.totalorder %s189, %s205
      %p207 = scmp.eq.s32.totalorder %s24, 0
      %p208 = por %p206, %p207
      %s209 = ssub.s32 %s18, %s25
      %p210 = scmp.eq.s32.totalorder %s209, 0
      %s212 = sadd.s32 %s211, 1
      %s213 = scalar_select %p210, %s211, %s212
      %p216 = pneg %p210
      %p217 = scmp.eq.s32.totalorder %s18, 1
      %p218 = por %p216, %p217
      %p219 = scmp.ne.s32.totalorder %s211, %s214
      %p220 = scmp.eq.s32.totalorder %s18, 0
      %p221 = por %p219, %p220
      %p222 = scmp.ne.s32.totalorder %s211, %s214
      %p223 = scmp.eq.s32.totalorder %s23, 1
      %p224 = por %p222, %p223
      %p225 = scmp.ne.s32.totalorder %s214, %s215
      %p226 = scmp.eq.s32.totalorder %s23, 0
      %p227 = por %p225, %p226
      %p228 = scmp.ne.s32.totalorder %s214, %s215
      %p229 = scmp.eq.s32.totalorder %s24, 1
      %p230 = por %p228, %p229
      %p232 = scmp.ne.s32.totalorder %s215, %s231
      %p233 = scmp.eq.s32.totalorder %s24, 0
      %p234 = por %p232, %p233
      %p235 = scmp.le.s32.totalorder 1, %s18
      %p236 = scmp.lt.s32.totalorder %s18, 3
      %p237 = pnand %p235, %p236
      %p238 = pneg %p237
      // Predicated region
      $region9: #{tpu_custom_call.1} parent=5 // pred_check
        _
      $region10: #{tpu_custom_call.1} parent=5 // pred_check_branch
        %240 = sbr.rel (%p237) target = $region12
      $region11: #{tpu_custom_call.1} parent=5 // pred_region
        %s241 = ssub.s32 %s18, 1
        // Predicated region
        $region13: #{tpu_custom_call.1} parent=11 // pred_check
          %p242 = pneg %p91
        $region14: #{tpu_custom_call.1} parent=11 // pred_check_branch
          %244 = sbr.rel (%p242) target = $region16
        $region15: #{tpu_custom_call.1} parent=11 // pred_region
          _
        $region16: #{tpu_custom_call.1} parent=11 // pred_fallthru
          _
        // Predicated region
        $region17: #{tpu_custom_call.1} parent=11 // pred_check
          %p245 = pneg %p112
        $region18: #{tpu_custom_call.1} parent=11 // pred_check_branch
          %247 = sbr.rel (%p245) target = $region20
        $region19: #{tpu_custom_call.1} parent=11 // pred_region
          _
        $region20: #{tpu_custom_call.1} parent=11 // pred_fallthru
          _
        // Predicated region
        $region21: #{tpu_custom_call.1} parent=11 // pred_check
          %p248 = pneg %p133
        $region22: #{tpu_custom_call.1} parent=11 // pred_check_branch
          %250 = sbr.rel (%p248) target = $region24
        $region23: #{tpu_custom_call.1} parent=11 // pred_region
          _
        $region24: #{tpu_custom_call.1} parent=11 // pred_fallthru
          _
        // Predicated region
        $region25: #{tpu_custom_call.1} parent=11 // pred_check
          %p251 = pneg %p154
        $region26: #{tpu_custom_call.1} parent=11 // pred_check_branch
          %253 = sbr.rel (%p251) target = $region28
        $region27: #{tpu_custom_call.1} parent=11 // pred_region
          _
        $region28: #{tpu_custom_call.1} parent=11 // pred_fallthru
          _
        // Predicated region
        $region29: #{tpu_custom_call.1} parent=11 // pred_check
          %p254 = pneg %p175
        $region30: #{tpu_custom_call.1} parent=11 // pred_check_branch
          %256 = sbr.rel (%p254) target = $region32
        $region31: #{tpu_custom_call.1} parent=11 // pred_region
          _
        $region32: #{tpu_custom_call.1} parent=11 // pred_fallthru
          _
      $region12: #{tpu_custom_call.1} parent=5 // pred_fallthru
        _
      %p257 = scmp.lt.s32.totalorder %s18, 2
      // Predicated region
      $region33: #{tpu_custom_call.1} parent=5 // pred_check
        %p258 = pneg %p257
      $region34: #{tpu_custom_call.1} parent=5 // pred_check_branch
        %260 = sbr.rel (%p258) target = $region36
      $region35: #{tpu_custom_call.1} parent=5 // pred_region
        // Predicated region
        $region37: #{tpu_custom_call.1} parent=35 // pred_check
          %p261 = pneg %p38
        $region38: #{tpu_custom_call.1} parent=35 // pred_check_branch
          %263 = sbr.rel (%p261) target = $region40
        $region39: #{tpu_custom_call.1} parent=35 // pred_region
          %p264 = scmp.lt.s32.totalorder %s18, 1
          %s265 = scalar_select %p264, %s18, 1
          %s266 = smul.addr %s265, 20
          %s267 = smul.addr %s266, 8
          %s268 = scalar_lea.vmem %s0, %s267
        $region40: #{tpu_custom_call.1} parent=35 // pred_fallthru
          _
        // Predicated region
        $region41: #{tpu_custom_call.1} parent=35 // pred_check
          %p269 = pneg %p64
        $region42: #{tpu_custom_call.1} parent=35 // pred_check_branch
          %271 = sbr.rel (%p269) target = $region44
        $region43: #{tpu_custom_call.1} parent=35 // pred_region
          %s272 = sand.u32 %s54, 1
          %s273 = scalar_lea.sflag [#allocation3], %s272
          %s274 = sand.u32 %s54, 1
          %s275 = smul.addr %s274, 160
          %s276 = scalar_lea.vmem [#allocation2], %s275
          %s278 = ssub.s32 2560, 2560
          %279 = vsyncadd %s273, %s278
          %s280 = smul.addr %s18, 20
          %s281 = smul.addr %s280, 128
          %s282 = scalar_lea.hbm %s1, %s281
          %s283 = sshll.u32 %s276, 4
          %s284 = int_to_ptr.vmem [resolvable:$true] %s283
          %289 = dma.hbm_to_vmem [thread:$0]  %s282, 2560, %s284, %s273, 640, 640, 40
        $region44: #{tpu_custom_call.1} parent=35 // pred_fallthru
          _
      $region36: #{tpu_custom_call.1} parent=5 // pred_fallthru
        _
      %p290 = scmp.le.s32.totalorder 1, %s18
      %p291 = scmp.lt.s32.totalorder %s18, 3
      %p292 = pnand %p290, %p291
      %p293 = pneg %p292
      // Predicated region
      $region45: #{tpu_custom_call.1} parent=5 // pred_check
        _
      $region46: #{tpu_custom_call.1} parent=5 // pred_check_branch
        %295 = sbr.rel (%p292) target = $region48
      $region47: #{tpu_custom_call.1} parent=5 // pred_region
        %s296 = ssub.s32 %s18, 1
        %s297 = sand.u32 %s57, 1
        %s298 = scalar_lea.sflag [#allocation3], %s297
        %s299 = sand.u32 %s57, 1
        %s300 = smul.addr %s299, 160
        %s301 = scalar_lea.vmem [#allocation2], %s300
        // Predicated region
        $region49: #{tpu_custom_call.1} parent=47 // pred_check
          %p302 = pneg %p70
        $region50: #{tpu_custom_call.1} parent=47 // pred_check_branch
          %304 = sbr.rel (%p302) target = $region52
        $region51: #{tpu_custom_call.1} parent=47 // pred_region
          %305 = dma.done %s298, 2560
        $region52: #{tpu_custom_call.1} parent=47 // pred_fallthru
          _
        %p306 = scmp.lt.s32.totalorder %s23, 1
        %s307 = scalar_select %p306, %s23, 1
        %s308 = smul.addr %s307, 20
        %s309 = smul.addr %s308, 8
        %s310 = scalar_lea.vmem %s0, %s309
        %p311 = pneg %p44
        %p312 = pneg %p41
        %s313 = sand.u32 %s57, 1
        %s314 = scalar_lea.sflag [#allocation3], %s313
        %s315 = sand.u32 %s57, 1
        %s316 = smul.addr %s315, 160
        %s317 = scalar_lea.vmem [#allocation2], %s316
        %p318 = pneg %p70
        %p319 = pneg %p67
        %p320 = pneg %p91
        %p321 = pneg %p88
        %p322 = pneg %p112
        %p323 = pneg %p109
        %p324 = pneg %p133
        %p325 = pneg %p130
        %p326 = pneg %p154
        %p327 = pneg %p151
        %p328 = pneg %p175
        %p329 = pneg %p172
        %p330 = pneg %p201
        %p331 = pneg %p198
        %p332 = scmp.lt.s32.totalorder %s23, 1
        %s333 = scalar_select %p332, %s23, 1
        %s334 = smul.addr %s333, 8
        %s335 = scalar_lea.vmem %s7, %s334
        %p336 = pneg %p227
        %p337 = pneg %p224
        %p338 = scmp.lt.s32.totalorder %s23, 1
        %s339 = scalar_select %p338, %s23, 1
        %s340 = smul.addr %s339, 8
        %s341 = scalar_lea.vmem %s8, %s340
        %p342 = scmp.lt.s32.totalorder %s23, 1
        %s343 = scalar_select %p342, %s23, 1
        %s344 = smul.addr %s343, 20
        %s345 = smul.addr %s344, 8
        %s346 = scalar_lea.vmem %s0, %s345
        %p347 = scmp.lt.s32.totalorder %s23, 1
        %s348 = scalar_select %p347, %s23, 1
        %s349 = smul.addr %s348, 8
        %s350 = scalar_lea.vmem %s7, %s349
        %p351 = scmp.lt.s32.totalorder %s23, 1
        %s352 = scalar_select %p351, %s23, 1
        %s353 = smul.addr %s352, 8
        %s354 = scalar_lea.vmem %s8, %s353
        %v355 = vld [vmem:[%s2] sm:$0xff]
        %v356 = vld [vmem:[%s2 + $0x8] sm:$0xff]
        %v357 = vld [vmem:[%s2 + $0x10] sm:$0xff]
        %v358 = vld [vmem:[%s2 + $0x18] sm:$0xff]
        %v359 = vld [vmem:[%s2 + $0x20] sm:$0xff]
        %v360 = vld [vmem:[%s2 + $0x28] sm:$0xff]
        %v361 = vld [vmem:[%s2 + $0x30] sm:$0xff]
        %v362 = vld [vmem:[%s2 + $0x38] sm:$0xff]
        %v363 = vld [vmem:[%s2 + $0x40] sm:$0xff]
        %v364 = vld [vmem:[%s2 + $0x48] sm:$0xff]
        %v365 = vld [vmem:[%s2 + $0x50] sm:$0xff]
        %v366 = vld [vmem:[%s2 + $0x58] sm:$0xff]
        %v367 = vld [vmem:[%s2 + $0x60] sm:$0xff]
        %v368 = vld [vmem:[%s2 + $0x68] sm:$0xff]
        %v369 = vld [vmem:[%s2 + $0x70] sm:$0xff]
        %v370 = vld [vmem:[%s2 + $0x78] sm:$0xff]
        %v371 = vld [vmem:[%s2 + $0x80] sm:$0xff]
        %v372 = vld [vmem:[%s2 + $0x88] sm:$0xff]
        %v373 = vld [vmem:[%s2 + $0x90] sm:$0xff]
        %v374 = vld [vmem:[%s2 + $0x98] sm:$0xff]
        %v375 = vld [vmem:[%s2 + $0xa0] sm:$0xff]
        %v376 = vld [vmem:[%s2 + $0xa8] sm:$0xff]
        %v377 = vld [vmem:[%s2 + $0xb0] sm:$0xff]
        %v378 = vld [vmem:[%s2 + $0xb8] sm:$0xff]
        %v379 = vld [vmem:[%s2 + $0xc0] sm:$0xff]
        %v380 = vld [vmem:[%s2 + $0xc8] sm:$0xff]
        %v381 = vld [vmem:[%s2 + $0xd0] sm:$0xff]
        %v382 = vld [vmem:[%s2 + $0xd8] sm:$0xff]
        %v383 = vld [vmem:[%s2 + $0xe0] sm:$0xff]
        %v384 = vld [vmem:[%s2 + $0xe8] sm:$0xff]
        %v385 = vld [vmem:[%s2 + $0xf0] sm:$0xff]
        %v386 = vld [vmem:[%s2 + $0xf8] sm:$0xff]
        %v387 = vld [vmem:[%s2 + $0x100] sm:$0xff]
        %v388 = vld [vmem:[%s2 + $0x108] sm:$0xff]
        %v389 = vld [vmem:[%s2 + $0x110] sm:$0xff]
        %v390 = vld [vmem:[%s2 + $0x118] sm:$0xff]
        %v391 = vld [vmem:[%s2 + $0x120] sm:$0xff]
        %v392 = vld [vmem:[%s2 + $0x128] sm:$0xff]
        %v393 = vld [vmem:[%s2 + $0x130] sm:$0xff]
        %v394 = vld [vmem:[%s2 + $0x138] sm:$0xff]
        %v395 = vld [vmem:[%s2 + $0x140] sm:$0xff]
        %v396 = vld [vmem:[%s2 + $0x148] sm:$0xff]
        %v397 = vld [vmem:[%s2 + $0x150] sm:$0xff]
        %v398 = vld [vmem:[%s2 + $0x158] sm:$0xff]
        %v399 = vld [vmem:[%s2 + $0x160] sm:$0xff]
        %v400 = vld [vmem:[%s2 + $0x168] sm:$0xff]
        %v401 = vld [vmem:[%s2 + $0x170] sm:$0xff]
        %v402 = vld [vmem:[%s2 + $0x178] sm:$0xff]
        %v403 = vld [vmem:[%s2 + $0x180] sm:$0xff]
        %v404 = vld [vmem:[%s2 + $0x188] sm:$0xff]
        %v405 = vld [vmem:[%s2 + $0x190] sm:$0xff]
        %v406 = vld [vmem:[%s2 + $0x198] sm:$0xff]
        %v407 = vld [vmem:[%s2 + $0x1a0] sm:$0xff]
        %v408 = vld [vmem:[%s2 + $0x1a8] sm:$0xff]
        %v409 = vld [vmem:[%s2 + $0x1b0] sm:$0xff]
        %v410 = vld [vmem:[%s2 + $0x1b8] sm:$0xff]
        %v411 = vld [vmem:[%s2 + $0x1c0] sm:$0xff]
        %v412 = vld [vmem:[%s2 + $0x1c8] sm:$0xff]
        %v413 = vld [vmem:[%s2 + $0x1d0] sm:$0xff]
        %v414 = vld [vmem:[%s2 + $0x1d8] sm:$0xff]
        %v415 = vld [vmem:[%s2 + $0x1e0] sm:$0xff]
        %v416 = vld [vmem:[%s2 + $0x1e8] sm:$0xff]
        %v417 = vld [vmem:[%s2 + $0x1f0] sm:$0xff]
        %v418 = vld [vmem:[%s2 + $0x1f8] sm:$0xff]
        %v419 = vld [vmem:[%s2 + $0x200] sm:$0xff]
        %v420 = vld [vmem:[%s2 + $0x208] sm:$0xff]
        %v421 = vld [vmem:[%s2 + $0x210] sm:$0xff]
        %v422 = vld [vmem:[%s2 + $0x218] sm:$0xff]
        %v423 = vld [vmem:[%s2 + $0x220] sm:$0xff]
        %v424 = vld [vmem:[%s2 + $0x228] sm:$0xff]
        %v425 = vld [vmem:[%s2 + $0x230] sm:$0xff]
        %v426 = vld [vmem:[%s2 + $0x238] sm:$0xff]
        %v427 = vld [vmem:[%s346] sm:$0xff]
        %v428 = vld [vmem:[%s346 + $0x8] sm:$0xff]
        %v429 = vld [vmem:[%s346 + $0x10] sm:$0xff]
        %v430 = vld [vmem:[%s346 + $0x18] sm:$0xff]
        %v431 = vld [vmem:[%s346 + $0x20] sm:$0xff]
        %v432 = vld [vmem:[%s346 + $0x28] sm:$0xff]
        %v433 = vld [vmem:[%s346 + $0x30] sm:$0xff]
        %v434 = vld [vmem:[%s346 + $0x38] sm:$0xff]
        %v435 = vld [vmem:[%s346 + $0x40] sm:$0xff]
        %v436 = vld [vmem:[%s346 + $0x48] sm:$0xff]
        %v437 = vld [vmem:[%s346 + $0x50] sm:$0xff]
        %v438 = vld [vmem:[%s346 + $0x58] sm:$0xff]
        %v439 = vld [vmem:[%s346 + $0x60] sm:$0xff]
        %v440 = vld [vmem:[%s346 + $0x68] sm:$0xff]
        %v441 = vld [vmem:[%s346 + $0x70] sm:$0xff]
        %v442 = vld [vmem:[%s346 + $0x78] sm:$0xff]
        %v443 = vld [vmem:[%s346 + $0x80] sm:$0xff]
        %v444 = vld [vmem:[%s346 + $0x88] sm:$0xff]
        %v445 = vld [vmem:[%s346 + $0x90] sm:$0xff]
        %v446 = vld [vmem:[%s346 + $0x98] sm:$0xff]
        %vm447 = vcmask 523264
        %v449 = vsel %vm447, %v431, 0
        %v452 = vsel %vm447, %v436, 0
        %v455 = vsel %vm447, %v441, 0
        %v458 = vsel %vm447, %v446, 0
        %460 = vmatprep.subr.mxu0 0.0
        %461 = vmatpush1.msra.mxu0 %v355
        %462 = vmatprep.subr.mxu0 0.0
        %463 = vmatpush1.msra.mxu0 %v356
        %464 = vmatprep.subr.mxu0 0.0
        %465 = vmatpush1.msra.mxu0 %v357
        %466 = vmatprep.subr.mxu0 0.0
        %467 = vmatpush1.msra.mxu0 %v358
        %468 = vmatprep.subr.mxu0 0.0
        %469 = vmatpush1.msra.mxu0 %v359
        %470 = vmatprep.subr.mxu0 0.0
        %471 = vmatpush1.msra.mxu0 %v360
        %472 = vmatprep.subr.mxu0 0.0
        %473 = vmatpush1.msra.mxu0 %v361
        %474 = vmatprep.subr.mxu0 0.0
        %475 = vmatpush1.msra.mxu0 %v362
        %476 = vmatprep.subr.mxu0 0.0
        %477 = vmatpush1.msra.mxu0 %v363
        %478 = vmatprep.subr.mxu0 0.0
        %479 = vmatpush1.msra.mxu0 %v364
        %480 = vmatprep.subr.mxu0 0.0
        %481 = vmatpush1.msra.mxu0 %v365
        %482 = vmatprep.subr.mxu0 0.0
        %483 = vmatpush1.msra.mxu0 %v366
        %484 = vmatprep.subr.mxu0 0.0
        %485 = vmatpush1.msra.mxu0 %v367
        %486 = vmatprep.subr.mxu0 0.0
        %487 = vmatpush1.msra.mxu0 %v368
        %488 = vmatprep.subr.mxu0 0.0
        %489 = vmatpush1.msra.mxu0 %v369
        %490 = vmatprep.subr.mxu0 0.0
        %491 = vmatpush1.msra.mxu0 %v370
        %492 = vmatprep.subr.mxu0 0.0
        %493 = vmatpush1.msra.mxu0 %v371
        %494 = vmatprep.subr.mxu0 0.0
        %495 = vmatpush1.msra.mxu0 %v372
        %496 = vmatprep.subr.mxu0 0.0
        %497 = vmatpush1.msra.mxu0 %v373
        %498 = vmatprep.subr.mxu0 0.0
        %499 = vmatpush1.msra.mxu0 %v374
        %500 = vmatprep.subr.mxu0 0.0
        %501 = vmatpush1.msra.mxu0 %v375
        %502 = vmatprep.subr.mxu0 0.0
        %503 = vmatpush1.msra.mxu0 %v376
        %504 = vmatprep.subr.mxu0 0.0
        %505 = vmatpush1.msra.mxu0 %v377
        %506 = vmatprep.subr.mxu0 0.0
        %507 = vmatpush1.msra.mxu0 %v378
        %508 = vmatprep.subr.mxu0 0.0
        %509 = vmatpush1.msra.mxu0 %v379
        %510 = vmatprep.subr.mxu0 0.0
        %511 = vmatpush1.msra.mxu0 %v380
        %512 = vmatprep.subr.mxu0 0.0
        %513 = vmatpush1.msra.mxu0 %v381
        %514 = vmatprep.subr.mxu0 0.0
        %515 = vmatpush1.msra.mxu0 %v382
        %516 = vmatprep.subr.mxu0 0.0
        %517 = vmatpush1.msra.mxu0 %v383
        %518 = vmatprep.subr.mxu0 0.0
        %519 = vmatpush1.msra.mxu0 %v384
        %520 = vmatprep.subr.mxu0 0.0
        %521 = vmatpush1.msra.mxu0 %v385
        %522 = vmatprep.subr.mxu0 0.0
        %523 = vmatpush1.msra.mxu0 %v386
        %524 = vmatprep.mubr.f32.mxu0 %v428
        %525 = vmatmul.mubr.f32.gmra.mrb[0].mxu0 %v427
        %v526 = vpop.f32.mrb[0].mxu0
        %v527 = vadd.f32 0.0, %v526
        %v528 = vpop.f32.mrb[0].mxu0
        %529 = vmatprep.mubr.f32.mxu0 %v433
        %530 = vmatmul.mubr.f32.gmra.mrb[0].mxu0 %v432
        %v531 = vpop.f32.mrb[0].mxu0
        %v532 = vadd.f32 0.0, %v531
        %v533 = vpop.f32.mrb[0].mxu0
        %534 = vmatprep.mubr.f32.mxu0 %v438
        %535 = vmatmul.mubr.f32.gmra.mrb[0].mxu0 %v437
        %v536 = vpop.f32.mrb[0].mxu0
        %v537 = vadd.f32 0.0, %v536
        %v538 = vpop.f32.mrb[0].mxu0
        %539 = vmatprep.mubr.f32.mxu0 %v443
        %540 = vmatmul.mubr.f32.gmra.mrb[0].mxu0 %v442
        %v541 = vpop.f32.mrb[0].mxu0
        %v542 = vadd.f32 0.0, %v541
        %v543 = vpop.f32.mrb[0].mxu0
        %544 = vdwg.mxu0
        %545 = vmatprep.subr.mxu0 0.0
        %546 = vmatpush1.msra.mxu0 %v387
        %547 = vmatprep.subr.mxu0 0.0
        %548 = vmatpush1.msra.mxu0 %v388
        %549 = vmatprep.subr.mxu0 0.0
        %550 = vmatpush1.msra.mxu0 %v389
        %551 = vmatprep.subr.mxu0 0.0
        %552 = vmatpush1.msra.mxu0 %v390
        %553 = vmatprep.subr.mxu0 0.0
        %554 = vmatpush1.msra.mxu0 %v391
        %555 = vmatprep.subr.mxu0 0.0
        %556 = vmatpush1.msra.mxu0 %v392
        %557 = vmatprep.subr.mxu0 0.0
        %558 = vmatpush1.msra.mxu0 %v393
        %559 = vmatprep.subr.mxu0 0.0
        %560 = vmatpush1.msra.mxu0 %v394
        %561 = vmatprep.subr.mxu0 0.0
        %562 = vmatpush1.msra.mxu0 %v395
        %563 = vmatprep.subr.mxu0 0.0
        %564 = vmatpush1.msra.mxu0 %v396
        %565 = vmatprep.subr.mxu0 0.0
        %566 = vmatpush1.msra.mxu0 %v397
        %567 = vmatprep.subr.mxu0 0.0
        %568 = vmatpush1.msra.mxu0 %v398
        %569 = vmatprep.subr.mxu0 0.0
        %570 = vmatpush1.msra.mxu0 %v399
        %571 = vmatprep.subr.mxu0 0.0
        %572 = vmatpush1.msra.mxu0 %v400
        %573 = vmatprep.subr.mxu0 0.0
        %574 = vmatpush1.msra.mxu0 %v401
        %575 = vmatprep.subr.mxu0 0.0
        %576 = vmatpush1.msra.mxu0 %v402
        %577 = vmatprep.subr.mxu0 0.0
        %578 = vmatpush1.msra.mxu0 %v403
        %579 = vmatprep.subr.mxu0 0.0
        %580 = vmatpush1.msra.mxu0 %v404
        %581 = vmatprep.subr.mxu0 0.0
        %582 = vmatpush1.msra.mxu0 %v405
        %583 = vmatprep.subr.mxu0 0.0
        %584 = vmatpush1.msra.mxu0 %v406
        %585 = vmatprep.subr.mxu0 0.0
        %586 = vmatpush1.msra.mxu0 %v407
        %587 = vmatprep.subr.mxu0 0.0
        %588 = vmatpush1.msra.mxu0 %v408
        %589 = vmatprep.subr.mxu0 0.0
        %590 = vmatpush1.msra.mxu0 %v409
        %591 = vmatprep.subr.mxu0 0.0
        %592 = vmatpush1.msra.mxu0 %v410
        %593 = vmatprep.subr.mxu0 0.0
        %594 = vmatpush1.msra.mxu0 %v411
        %595 = vmatprep.subr.mxu0 0.0
        %596 = vmatpush1.msra.mxu0 %v412
        %597 = vmatprep.subr.mxu0 0.0
        %598 = vmatpush1.msra.mxu0 %v413
        %599 = vmatprep.subr.mxu0 0.0
        %600 = vmatpush1.msra.mxu0 %v414
        %601 = vmatprep.subr.mxu0 0.0
        %602 = vmatpush1.msra.mxu0 %v415
        %603 = vmatprep.subr.mxu0 0.0
        %604 = vmatpush1.msra.mxu0 %v416
        %605 = vmatprep.subr.mxu0 0.0
        %606 = vmatpush1.msra.mxu0 %v417
        %607 = vmatprep.subr.mxu0 0.0
        %608 = vmatpush1.msra.mxu0 %v418
        %609 = vmatprep.mubr.f32.mxu0 %v430
        %610 = vmatmul.mubr.f32.gmra.mrb[0].mxu0 %v429
        %v611 = vpop.f32.mrb[0].mxu0
        %v612 = vadd.f32 %v527, %v611
        %v613 = vpop.f32.mrb[0].mxu0
        %614 = vmatprep.mubr.f32.mxu0 %v435
        %615 = vmatmul.mubr.f32.gmra.mrb[0].mxu0 %v434
        %v616 = vpop.f32.mrb[0].mxu0
        %v617 = vadd.f32 %v532, %v616
        %v618 = vpop.f32.mrb[0].mxu0
        %619 = vmatprep.mubr.f32.mxu0 %v440
        %620 = vmatmul.mubr.f32.gmra.mrb[0].mxu0 %v439
        %v621 = vpop.f32.mrb[0].mxu0
        %v622 = vadd.f32 %v537, %v621
        %v623 = vpop.f32.mrb[0].mxu0
        %624 = vmatprep.mubr.f32.mxu0 %v445
        %625 = vmatmul.mubr.f32.gmra.mrb[0].mxu0 %v444
        %v626 = vpop.f32.mrb[0].mxu0
        %v627 = vadd.f32 %v542, %v626
        %v628 = vpop.f32.mrb[0].mxu0
        %629 = vdwg.mxu0
        %630 = vmatprep.subr.mxu0 0.0
        %631 = vmatpush1.msra.mxu0 %v419
        %632 = vmatprep.subr.mxu0 0.0
        %633 = vmatpush1.msra.mxu0 %v420
        %634 = vmatprep.subr.mxu0 0.0
        %635 = vmatpush1.msra.mxu0 %v421
        %636 = vmatprep.subr.mxu0 0.0
        %637 = vmatpush1.msra.mxu0 %v422
        %638 = vmatprep.subr.mxu0 0.0
        %639 = vmatpush1.msra.mxu0 %v423
        %640 = vmatprep.subr.mxu0 0.0
        %641 = vmatpush1.msra.mxu0 %v424
        %642 = vmatprep.subr.mxu0 0.0
        %643 = vmatpush1.msra.mxu0 %v425
        %644 = vmatprep.subr.mxu0 0.0
        %645 = vmatpush1.msra.mxu0 %v426
        %646 = vmatprep.subr.mxu0 0.0
        %647 = vmatpush1.msra.mxu0 0.0
        %648 = vmatprep.subr.mxu0 0.0
        %649 = vmatpush1.msra.mxu0 0.0
        %650 = vmatprep.subr.mxu0 0.0
        %651 = vmatpush1.msra.mxu0 0.0
        %652 = vmatprep.subr.mxu0 0.0
        %653 = vmatpush1.msra.mxu0 0.0
        %654 = vmatprep.subr.mxu0 0.0
        %655 = vmatpush1.msra.mxu0 0.0
        %656 = vmatprep.subr.mxu0 0.0
        %657 = vmatpush1.msra.mxu0 0.0
        %658 = vmatprep.subr.mxu0 0.0
        %659 = vmatpush1.msra.mxu0 0.0
        %660 = vmatprep.subr.mxu0 0.0
        %661 = vmatpush1.msra.mxu0 0.0
        %662 = vmatprep.subr.mxu0 0.0
        %663 = vmatpush1.msra.mxu0 0.0
        %664 = vmatprep.subr.mxu0 0.0
        %665 = vmatpush1.msra.mxu0 0.0
        %666 = vmatprep.subr.mxu0 0.0
        %667 = vmatpush1.msra.mxu0 0.0
        %668 = vmatprep.subr.mxu0 0.0
        %669 = vmatpush1.msra.mxu0 0.0
        %670 = vmatprep.subr.mxu0 0.0
        %671 = vmatpush1.msra.mxu0 0.0
        %672 = vmatprep.subr.mxu0 0.0
        %673 = vmatpush1.msra.mxu0 0.0
        %674 = vmatprep.subr.mxu0 0.0
        %675 = vmatpush1.msra.mxu0 0.0
        %676 = vmatprep.subr.mxu0 0.0
        %677 = vmatpush1.msra.mxu0 0.0
        %678 = vmatprep.subr.mxu0 0.0
        %679 = vmatpush1.msra.mxu0 0.0
        %680 = vmatprep.subr.mxu0 0.0
        %681 = vmatpush1.msra.mxu0 0.0
        %682 = vmatprep.subr.mxu0 0.0
        %683 = vmatpush1.msra.mxu0 0.0
        %684 = vmatprep.subr.mxu0 0.0
        %685 = vmatpush1.msra.mxu0 0.0
        %686 = vmatprep.subr.mxu0 0.0
        %687 = vmatpush1.msra.mxu0 0.0
        %688 = vmatprep.subr.mxu0 0.0
        %689 = vmatpush1.msra.mxu0 0.0
        %690 = vmatprep.subr.mxu0 0.0
        %691 = vmatpush1.msra.mxu0 0.0
        %692 = vmatprep.subr.mxu0 0.0
        %693 = vmatpush1.msra.mxu0 0.0
        %694 = vmatprep.mubr.f32.mxu0 0.0
        %695 = vmatmul.mubr.f32.gmra.mrb[0].mxu0 %v449
        %v696 = vpop.f32.mrb[0].mxu0
        %v697 = vadd.f32 %v612, %v696
        %v698 = vpop.f32.mrb[0].mxu0
        %699 = vmatprep.mubr.f32.mxu0 0.0
        %700 = vmatmul.mubr.f32.gmra.mrb[0].mxu0 %v452
        %v701 = vpop.f32.mrb[0].mxu0
        %v702 = vadd.f32 %v617, %v701
        %v703 = vpop.f32.mrb[0].mxu0
        %704 = vmatprep.mubr.f32.mxu0 0.0
        %705 = vmatmul.mubr.f32.gmra.mrb[0].mxu0 %v455
        %v706 = vpop.f32.mrb[0].mxu0
        %v707 = vadd.f32 %v622, %v706
        %v708 = vpop.f32.mrb[0].mxu0
        %709 = vmatprep.mubr.f32.mxu0 0.0
        %710 = vmatmul.mubr.f32.gmra.mrb[0].mxu0 %v458
        %v711 = vpop.f32.mrb[0].mxu0
        %v712 = vadd.f32 %v627, %v711
        %v713 = vpop.f32.mrb[0].mxu0
        %714 = vdwg.mxu0
        %v715 = vld [vmem:[%s3] sm:$0xff]
        %v716 = vld [vmem:[%s5] sm:$0xff]
        %718 = vset.pattern.permute.xlu0 0
        %719 = vperm.xlu0 %718, %v716
        %v720 = vpop.permute.xlu0 %719
        %vm722 = vcmask 261120
        %v724 = vsel %vm722, %v715, 0
        %726 = vmatprep.subr.mxu0 0.0
        %727 = vmatpush1.msra.mxu0 %v697
        %728 = vmatprep.subr.mxu0 0.0
        %729 = vmatpush1.msra.mxu0 %v702
        %730 = vmatprep.subr.mxu0 0.0
        %731 = vmatpush1.msra.mxu0 %v707
        %732 = vmatprep.subr.mxu0 0.0
        %733 = vmatpush1.msra.mxu0 %v712
        %734 = vmatprep.subr.mxu0 0.0
        %735 = vmatpush1.msra.mxu0 0.0
        %736 = vmatprep.subr.mxu0 0.0
        %737 = vmatpush1.msra.mxu0 0.0
        %738 = vmatprep.subr.mxu0 0.0
        %739 = vmatpush1.msra.mxu0 0.0
        %740 = vmatprep.subr.mxu0 0.0
        %741 = vmatpush1.msra.mxu0 0.0
        %742 = vmatprep.subr.mxu0 0.0
        %743 = vmatpush1.msra.mxu0 0.0
        %744 = vmatprep.subr.mxu0 0.0
        %745 = vmatpush1.msra.mxu0 0.0
        %746 = vmatprep.subr.mxu0 0.0
        %747 = vmatpush1.msra.mxu0 0.0
        %748 = vmatprep.subr.mxu0 0.0
        %749 = vmatpush1.msra.mxu0 0.0
        %750 = vmatprep.subr.mxu0 0.0
        %751 = vmatpush1.msra.mxu0 0.0
        %752 = vmatprep.subr.mxu0 0.0
        %753 = vmatpush1.msra.mxu0 0.0
        %754 = vmatprep.subr.mxu0 0.0
        %755 = vmatpush1.msra.mxu0 0.0
        %756 = vmatprep.subr.mxu0 0.0
        %757 = vmatpush1.msra.mxu0 0.0
        %758 = vmatprep.subr.mxu0 0.0
        %759 = vmatpush1.msra.mxu0 0.0
        %760 = vmatprep.subr.mxu0 0.0
        %761 = vmatpush1.msra.mxu0 0.0
        %762 = vmatprep.subr.mxu0 0.0
        %763 = vmatpush1.msra.mxu0 0.0
        %764 = vmatprep.subr.mxu0 0.0
        %765 = vmatpush1.msra.mxu0 0.0
        %766 = vmatprep.subr.mxu0 0.0
        %767 = vmatpush1.msra.mxu0 0.0
        %768 = vmatprep.subr.mxu0 0.0
        %769 = vmatpush1.msra.mxu0 0.0
        %770 = vmatprep.subr.mxu0 0.0
        %771 = vmatpush1.msra.mxu0 0.0
        %772 = vmatprep.subr.mxu0 0.0
        %773 = vmatpush1.msra.mxu0 0.0
        %774 = vmatprep.subr.mxu0 0.0
        %775 = vmatpush1.msra.mxu0 0.0
        %776 = vmatprep.subr.mxu0 0.0
        %777 = vmatpush1.msra.mxu0 0.0
        %778 = vmatprep.subr.mxu0 0.0
        %779 = vmatpush1.msra.mxu0 0.0
        %780 = vmatprep.subr.mxu0 0.0
        %781 = vmatpush1.msra.mxu0 0.0
        %782 = vmatprep.subr.mxu0 0.0
        %783 = vmatpush1.msra.mxu0 0.0
        %784 = vmatprep.subr.mxu0 0.0
        %785 = vmatpush1.msra.mxu0 0.0
        %786 = vmatprep.subr.mxu0 0.0
        %787 = vmatpush1.msra.mxu0 0.0
        %788 = vmatprep.subr.mxu0 0.0
        %789 = vmatpush1.msra.mxu0 0.0
        %790 = vmatprep.mubr.f32.mxu0 0.0
        %791 = vmatmul.mubr.f32.gmra.mrb[0].mxu0 %v724
        %v792 = vpop.f32.mrb[0].mxu0
        %v793 = vadd.f32 %v720, %v792
        %v794 = vpop.f32.mrb[0].mxu0
        %795 = vdwg.mxu0
        %vm796 = vcmask 31744
        %797 = vst.msk [vmem:[%s350] sm:$0xff] %vm796, %v793
        %v798 = vld [vmem:[%s301] sm:$0xff]
        %v799 = vld [vmem:[%s301 + $0x8] sm:$0xff]
        %v800 = vld [vmem:[%s301 + $0x10] sm:$0xff]
        %v801 = vld [vmem:[%s301 + $0x18] sm:$0xff]
        %v802 = vld [vmem:[%s301 + $0x20] sm:$0xff]
        %v803 = vld [vmem:[%s301 + $0x28] sm:$0xff]
        %v804 = vld [vmem:[%s301 + $0x30] sm:$0xff]
        %v805 = vld [vmem:[%s301 + $0x38] sm:$0xff]
        %v806 = vld [vmem:[%s301 + $0x40] sm:$0xff]
        %v807 = vld [vmem:[%s301 + $0x48] sm:$0xff]
        %v808 = vld [vmem:[%s301 + $0x50] sm:$0xff]
        %v809 = vld [vmem:[%s301 + $0x58] sm:$0xff]
        %v810 = vld [vmem:[%s301 + $0x60] sm:$0xff]
        %v811 = vld [vmem:[%s301 + $0x68] sm:$0xff]
        %v812 = vld [vmem:[%s301 + $0x70] sm:$0xff]
        %v813 = vld [vmem:[%s301 + $0x78] sm:$0xff]
        %v814 = vld [vmem:[%s301 + $0x80] sm:$0xff]
        %v815 = vld [vmem:[%s301 + $0x88] sm:$0xff]
        %v816 = vld [vmem:[%s301 + $0x90] sm:$0xff]
        %v817 = vld [vmem:[%s301 + $0x98] sm:$0xff]
        %v819 = vsel %vm447, %v802, 0
        %v822 = vsel %vm447, %v807, 0
        %v825 = vsel %vm447, %v812, 0
        %v828 = vsel %vm447, %v817, 0
        %830 = vmatprep.subr.mxu0 0.0
        %831 = vmatpush1.msra.mxu0 %v355
        %832 = vmatprep.subr.mxu0 0.0
        %833 = vmatpush1.msra.mxu0 %v356
        %834 = vmatprep.subr.mxu0 0.0
        %835 = vmatpush1.msra.mxu0 %v357
        %836 = vmatprep.subr.mxu0 0.0
        %837 = vmatpush1.msra.mxu0 %v358
        %838 = vmatprep.subr.mxu0 0.0
        %839 = vmatpush1.msra.mxu0 %v359
        %840 = vmatprep.subr.mxu0 0.0
        %841 = vmatpush1.msra.mxu0 %v360
        %842 = vmatprep.subr.mxu0 0.0
        %843 = vmatpush1.msra.mxu0 %v361
        %844 = vmatprep.subr.mxu0 0.0
        %845 = vmatpush1.msra.mxu0 %v362
        %846 = vmatprep.subr.mxu0 0.0
        %847 = vmatpush1.msra.mxu0 %v363
        %848 = vmatprep.subr.mxu0 0.0
        %849 = vmatpush1.msra.mxu0 %v364
        %850 = vmatprep.subr.mxu0 0.0
        %851 = vmatpush1.msra.mxu0 %v365
        %852 = vmatprep.subr.mxu0 0.0
        %853 = vmatpush1.msra.mxu0 %v366
        %854 = vmatprep.subr.mxu0 0.0
        %855 = vmatpush1.msra.mxu0 %v367
        %856 = vmatprep.subr.mxu0 0.0
        %857 = vmatpush1.msra.mxu0 %v368
        %858 = vmatprep.subr.mxu0 0.0
        %859 = vmatpush1.msra.mxu0 %v369
        %860 = vmatprep.subr.mxu0 0.0
        %861 = vmatpush1.msra.mxu0 %v370
        %862 = vmatprep.subr.mxu0 0.0
        %863 = vmatpush1.msra.mxu0 %v371
        %864 = vmatprep.subr.mxu0 0.0
        %865 = vmatpush1.msra.mxu0 %v372
        %866 = vmatprep.subr.mxu0 0.0
        %867 = vmatpush1.msra.mxu0 %v373
        %868 = vmatprep.subr.mxu0 0.0
        %869 = vmatpush1.msra.mxu0 %v374
        %870 = vmatprep.subr.mxu0 0.0
        %871 = vmatpush1.msra.mxu0 %v375
        %872 = vmatprep.subr.mxu0 0.0
        %873 = vmatpush1.msra.mxu0 %v376
        %874 = vmatprep.subr.mxu0 0.0
        %875 = vmatpush1.msra.mxu0 %v377
        %876 = vmatprep.subr.mxu0 0.0
        %877 = vmatpush1.msra.mxu0 %v378
        %878 = vmatprep.subr.mxu0 0.0
        %879 = vmatpush1.msra.mxu0 %v379
        %880 = vmatprep.subr.mxu0 0.0
        %881 = vmatpush1.msra.mxu0 %v380
        %882 = vmatprep.subr.mxu0 0.0
        %883 = vmatpush1.msra.mxu0 %v381
        %884 = vmatprep.subr.mxu0 0.0
        %885 = vmatpush1.msra.mxu0 %v382
        %886 = vmatprep.subr.mxu0 0.0
        %887 = vmatpush1.msra.mxu0 %v383
        %888 = vmatprep.subr.mxu0 0.0
        %889 = vmatpush1.msra.mxu0 %v384
        %890 = vmatprep.subr.mxu0 0.0
        %891 = vmatpush1.msra.mxu0 %v385
        %892 = vmatprep.subr.mxu0 0.0
        %893 = vmatpush1.msra.mxu0 %v386
        %894 = vmatprep.mubr.f32.mxu0 %v799
        %895 = vmatmul.mubr.f32.gmra.mrb[0].mxu0 %v798
        %v896 = vpop.f32.mrb[0].mxu0
        %v897 = vadd.f32 0.0, %v896
        %v898 = vpop.f32.mrb[0].mxu0
        %899 = vmatprep.mubr.f32.mxu0 %v804
        %900 = vmatmul.mubr.f32.gmra.mrb[0].mxu0 %v803
        %v901 = vpop.f32.mrb[0].mxu0
        %v902 = vadd.f32 0.0, %v901
        %v903 = vpop.f32.mrb[0].mxu0
        %904 = vmatprep.mubr.f32.mxu0 %v809
        %905 = vmatmul.mubr.f32.gmra.mrb[0].mxu0 %v808
        %v906 = vpop.f32.mrb[0].mxu0
        %v907 = vadd.f32 0.0, %v906
        %v908 = vpop.f32.mrb[0].mxu0
        %909 = vmatprep.mubr.f32.mxu0 %v814
        %910 = vmatmul.mubr.f32.gmra.mrb[0].mxu0 %v813
        %v911 = vpop.f32.mrb[0].mxu0
        %v912 = vadd.f32 0.0, %v911
        %v913 = vpop.f32.mrb[0].mxu0
        %914 = vdwg.mxu0
        %915 = vmatprep.subr.mxu0 0.0
        %916 = vmatpush1.msra.mxu0 %v387
        %917 = vmatprep.subr.mxu0 0.0
        %918 = vmatpush1.msra.mxu0 %v388
        %919 = vmatprep.subr.mxu0 0.0
        %920 = vmatpush1.msra.mxu0 %v389
        %921 = vmatprep.subr.mxu0 0.0
        %922 = vmatpush1.msra.mxu0 %v390
        %923 = vmatprep.subr.mxu0 0.0
        %924 = vmatpush1.msra.mxu0 %v391
        %925 = vmatprep.subr.mxu0 0.0
        %926 = vmatpush1.msra.mxu0 %v392
        %927 = vmatprep.subr.mxu0 0.0
        %928 = vmatpush1.msra.mxu0 %v393
        %929 = vmatprep.subr.mxu0 0.0
        %930 = vmatpush1.msra.mxu0 %v394
        %931 = vmatprep.subr.mxu0 0.0
        %932 = vmatpush1.msra.mxu0 %v395
        %933 = vmatprep.subr.mxu0 0.0
        %934 = vmatpush1.msra.mxu0 %v396
        %935 = vmatprep.subr.mxu0 0.0
        %936 = vmatpush1.msra.mxu0 %v397
        %937 = vmatprep.subr.mxu0 0.0
        %938 = vmatpush1.msra.mxu0 %v398
        %939 = vmatprep.subr.mxu0 0.0
        %940 = vmatpush1.msra.mxu0 %v399
        %941 = vmatprep.subr.mxu0 0.0
        %942 = vmatpush1.msra.mxu0 %v400
        %943 = vmatprep.subr.mxu0 0.0
        %944 = vmatpush1.msra.mxu0 %v401
        %945 = vmatprep.subr.mxu0 0.0
        %946 = vmatpush1.msra.mxu0 %v402
        %947 = vmatprep.subr.mxu0 0.0
        %948 = vmatpush1.msra.mxu0 %v403
        %949 = vmatprep.subr.mxu0 0.0
        %950 = vmatpush1.msra.mxu0 %v404
        %951 = vmatprep.subr.mxu0 0.0
        %952 = vmatpush1.msra.mxu0 %v405
        %953 = vmatprep.subr.mxu0 0.0
        %954 = vmatpush1.msra.mxu0 %v406
        %955 = vmatprep.subr.mxu0 0.0
        %956 = vmatpush1.msra.mxu0 %v407
        %957 = vmatprep.subr.mxu0 0.0
        %958 = vmatpush1.msra.mxu0 %v408
        %959 = vmatprep.subr.mxu0 0.0
        %960 = vmatpush1.msra.mxu0 %v409
        %961 = vmatprep.subr.mxu0 0.0
        %962 = vmatpush1.msra.mxu0 %v410
        %963 = vmatprep.subr.mxu0 0.0
        %964 = vmatpush1.msra.mxu0 %v411
        %965 = vmatprep.subr.mxu0 0.0
        %966 = vmatpush1.msra.mxu0 %v412
        %967 = vmatprep.subr.mxu0 0.0
        %968 = vmatpush1.msra.mxu0 %v413
        %969 = vmatprep.subr.mxu0 0.0
        %970 = vmatpush1.msra.mxu0 %v414
        %971 = vmatprep.subr.mxu0 0.0
        %972 = vmatpush1.msra.mxu0 %v415
        %973 = vmatprep.subr.mxu0 0.0
        %974 = vmatpush1.msra.mxu0 %v416
        %975 = vmatprep.subr.mxu0 0.0
        %976 = vmatpush1.msra.mxu0 %v417
        %977 = vmatprep.subr.mxu0 0.0
        %978 = vmatpush1.msra.mxu0 %v418
        %979 = vmatprep.mubr.f32.mxu0 %v801
        %980 = vmatmul.mubr.f32.gmra.mrb[0].mxu0 %v800
        %v981 = vpop.f32.mrb[0].mxu0
        %v982 = vadd.f32 %v897, %v981
        %v983 = vpop.f32.mrb[0].mxu0
        %984 = vmatprep.mubr.f32.mxu0 %v806
        %985 = vmatmul.mubr.f32.gmra.mrb[0].mxu0 %v805
        %v986 = vpop.f32.mrb[0].mxu0
        %v987 = vadd.f32 %v902, %v986
        %v988 = vpop.f32.mrb[0].mxu0
        %989 = vmatprep.mubr.f32.mxu0 %v811
        %990 = vmatmul.mubr.f32.gmra.mrb[0].mxu0 %v810
        %v991 = vpop.f32.mrb[0].mxu0
        %v992 = vadd.f32 %v907, %v991
        %v993 = vpop.f32.mrb[0].mxu0
        %994 = vmatprep.mubr.f32.mxu0 %v816
        %995 = vmatmul.mubr.f32.gmra.mrb[0].mxu0 %v815
        %v996 = vpop.f32.mrb[0].mxu0
        %v997 = vadd.f32 %v912, %v996
        %v998 = vpop.f32.mrb[0].mxu0
        %999 = vdwg.mxu0
        %1000 = vmatprep.subr.mxu0 0.0
        %1001 = vmatpush1.msra.mxu0 %v419
        %1002 = vmatprep.subr.mxu0 0.0
        %1003 = vmatpush1.msra.mxu0 %v420
        %1004 = vmatprep.subr.mxu0 0.0
        %1005 = vmatpush1.msra.mxu0 %v421
        %1006 = vmatprep.subr.mxu0 0.0
        %1007 = vmatpush1.msra.mxu0 %v422
        %1008 = vmatprep.subr.mxu0 0.0
        %1009 = vmatpush1.msra.mxu0 %v423
        %1010 = vmatprep.subr.mxu0 0.0
        %1011 = vmatpush1.msra.mxu0 %v424
        %1012 = vmatprep.subr.mxu0 0.0
        %1013 = vmatpush1.msra.mxu0 %v425
        %1014 = vmatprep.subr.mxu0 0.0
        %1015 = vmatpush1.msra.mxu0 %v426
        %1016 = vmatprep.subr.mxu0 0.0
        %1017 = vmatpush1.msra.mxu0 0.0
        %1018 = vmatprep.subr.mxu0 0.0
        %1019 = vmatpush1.msra.mxu0 0.0
        %1020 = vmatprep.subr.mxu0 0.0
        %1021 = vmatpush1.msra.mxu0 0.0
        %1022 = vmatprep.subr.mxu0 0.0
        %1023 = vmatpush1.msra.mxu0 0.0
        %1024 = vmatprep.subr.mxu0 0.0
        %1025 = vmatpush1.msra.mxu0 0.0
        %1026 = vmatprep.subr.mxu0 0.0
        %1027 = vmatpush1.msra.mxu0 0.0
        %1028 = vmatprep.subr.mxu0 0.0
        %1029 = vmatpush1.msra.mxu0 0.0
        %1030 = vmatprep.subr.mxu0 0.0
        %1031 = vmatpush1.msra.mxu0 0.0
        %1032 = vmatprep.subr.mxu0 0.0
        %1033 = vmatpush1.msra.mxu0 0.0
        %1034 = vmatprep.subr.mxu0 0.0
        %1035 = vmatpush1.msra.mxu0 0.0
        %1036 = vmatprep.subr.mxu0 0.0
        %1037 = vmatpush1.msra.mxu0 0.0
        %1038 = vmatprep.subr.mxu0 0.0
        %1039 = vmatpush1.msra.mxu0 0.0
        %1040 = vmatprep.subr.mxu0 0.0
        %1041 = vmatpush1.msra.mxu0 0.0
        %1042 = vmatprep.subr.mxu0 0.0
        %1043 = vmatpush1.msra.mxu0 0.0
        %1044 = vmatprep.subr.mxu0 0.0
        %1045 = vmatpush1.msra.mxu0 0.0
        %1046 = vmatprep.subr.mxu0 0.0
        %1047 = vmatpush1.msra.mxu0 0.0
        %1048 = vmatprep.subr.mxu0 0.0
        %1049 = vmatpush1.msra.mxu0 0.0
        %1050 = vmatprep.subr.mxu0 0.0
        %1051 = vmatpush1.msra.mxu0 0.0
        %1052 = vmatprep.subr.mxu0 0.0
        %1053 = vmatpush1.msra.mxu0 0.0
        %1054 = vmatprep.subr.mxu0 0.0
        %1055 = vmatpush1.msra.mxu0 0.0
        %1056 = vmatprep.subr.mxu0 0.0
        %1057 = vmatpush1.msra.mxu0 0.0
        %1058 = vmatprep.subr.mxu0 0.0
        %1059 = vmatpush1.msra.mxu0 0.0
        %1060 = vmatprep.subr.mxu0 0.0
        %1061 = vmatpush1.msra.mxu0 0.0
        %1062 = vmatprep.subr.mxu0 0.0
        %1063 = vmatpush1.msra.mxu0 0.0
        %1064 = vmatprep.mubr.f32.mxu0 0.0
        %1065 = vmatmul.mubr.f32.gmra.mrb[0].mxu0 %v819
        %v1066 = vpop.f32.mrb[0].mxu0
        %v1067 = vadd.f32 %v982, %v1066
        %v1068 = vpop.f32.mrb[0].mxu0
        %1069 = vmatprep.mubr.f32.mxu0 0.0
        %1070 = vmatmul.mubr.f32.gmra.mrb[0].mxu0 %v822
        %v1071 = vpop.f32.mrb[0].mxu0
        %v1072 = vadd.f32 %v987, %v1071
        %v1073 = vpop.f32.mrb[0].mxu0
        %1074 = vmatprep.mubr.f32.mxu0 0.0
        %1075 = vmatmul.mubr.f32.gmra.mrb[0].mxu0 %v825
        %v1076 = vpop.f32.mrb[0].mxu0
        %v1077 = vadd.f32 %v992, %v1076
        %v1078 = vpop.f32.mrb[0].mxu0
        %1079 = vmatprep.mubr.f32.mxu0 0.0
        %1080 = vmatmul.mubr.f32.gmra.mrb[0].mxu0 %v828
        %v1081 = vpop.f32.mrb[0].mxu0
        %v1082 = vadd.f32 %v997, %v1081
        %v1083 = vpop.f32.mrb[0].mxu0
        %1084 = vdwg.mxu0
        %v1085 = vld [vmem:[%s4] sm:$0xff]
        %v1086 = vld [vmem:[%s6] sm:$0xff]
        %1088 = vset.pattern.permute.xlu0 0
        %1089 = vperm.xlu0 %1088, %v1086
        %v1090 = vpop.permute.xlu0 %1089
        %v1093 = vsel %vm722, %v1085, 0
        %1095 = vmatprep.subr.mxu0 0.0
        %1096 = vmatpush1.msra.mxu0 %v1067
        %1097 = vmatprep.subr.mxu0 0.0
        %1098 = vmatpush1.msra.mxu0 %v1072
        %1099 = vmatprep.subr.mxu0 0.0
        %1100 = vmatpush1.msra.mxu0 %v1077
        %1101 = vmatprep.subr.mxu0 0.0
        %1102 = vmatpush1.msra.mxu0 %v1082
        %1103 = vmatprep.subr.mxu0 0.0
        %1104 = vmatpush1.msra.mxu0 0.0
        %1105 = vmatprep.subr.mxu0 0.0
        %1106 = vmatpush1.msra.mxu0 0.0
        %1107 = vmatprep.subr.mxu0 0.0
        %1108 = vmatpush1.msra.mxu0 0.0
        %1109 = vmatprep.subr.mxu0 0.0
        %1110 = vmatpush1.msra.mxu0 0.0
        %1111 = vmatprep.subr.mxu0 0.0
        %1112 = vmatpush1.msra.mxu0 0.0
        %1113 = vmatprep.subr.mxu0 0.0
        %1114 = vmatpush1.msra.mxu0 0.0
        %1115 = vmatprep.subr.mxu0 0.0
        %1116 = vmatpush1.msra.mxu0 0.0
        %1117 = vmatprep.subr.mxu0 0.0
        %1118 = vmatpush1.msra.mxu0 0.0
        %1119 = vmatprep.subr.mxu0 0.0
        %1120 = vmatpush1.msra.mxu0 0.0
        %1121 = vmatprep.subr.mxu0 0.0
        %1122 = vmatpush1.msra.mxu0 0.0
        %1123 = vmatprep.subr.mxu0 0.0
        %1124 = vmatpush1.msra.mxu0 0.0
        %1125 = vmatprep.subr.mxu0 0.0
        %1126 = vmatpush1.msra.mxu0 0.0
        %1127 = vmatprep.subr.mxu0 0.0
        %1128 = vmatpush1.msra.mxu0 0.0
        %1129 = vmatprep.subr.mxu0 0.0
        %1130 = vmatpush1.msra.mxu0 0.0
        %1131 = vmatprep.subr.mxu0 0.0
        %1132 = vmatpush1.msra.mxu0 0.0
        %1133 = vmatprep.subr.mxu0 0.0
        %1134 = vmatpush1.msra.mxu0 0.0
        %1135 = vmatprep.subr.mxu0 0.0
        %1136 = vmatpush1.msra.mxu0 0.0
        %1137 = vmatprep.subr.mxu0 0.0
        %1138 = vmatpush1.msra.mxu0 0.0
        %1139 = vmatprep.subr.mxu0 0.0
        %1140 = vmatpush1.msra.mxu0 0.0
        %1141 = vmatprep.subr.mxu0 0.0
        %1142 = vmatpush1.msra.mxu0 0.0
        %1143 = vmatprep.subr.mxu0 0.0
        %1144 = vmatpush1.msra.mxu0 0.0
        %1145 = vmatprep.subr.mxu0 0.0
        %1146 = vmatpush1.msra.mxu0 0.0
        %1147 = vmatprep.subr.mxu0 0.0
        %1148 = vmatpush1.msra.mxu0 0.0
        %1149 = vmatprep.subr.mxu0 0.0
        %1150 = vmatpush1.msra.mxu0 0.0
        %1151 = vmatprep.subr.mxu0 0.0
        %1152 = vmatpush1.msra.mxu0 0.0
        %1153 = vmatprep.subr.mxu0 0.0
        %1154 = vmatpush1.msra.mxu0 0.0
        %1155 = vmatprep.subr.mxu0 0.0
        %1156 = vmatpush1.msra.mxu0 0.0
        %1157 = vmatprep.subr.mxu0 0.0
        %1158 = vmatpush1.msra.mxu0 0.0
        %1159 = vmatprep.mubr.f32.mxu0 0.0
        %1160 = vmatmul.mubr.f32.gmra.mrb[0].mxu0 %v1093
        %v1161 = vpop.f32.mrb[0].mxu0
        %v1162 = vadd.f32 %v1090, %v1161
        %v1163 = vpop.f32.mrb[0].mxu0
        %1164 = vdwg.mxu0
        %1165 = vst.msk [vmem:[%s354] sm:$0xff] %vm796, %v1162
        %p1166 = scmp.lt.s32.totalorder %s23, 1
        %s1167 = scalar_select %p1166, %s23, 1
        %s1168 = smul.addr %s1167, 8
        %s1169 = scalar_lea.vmem %s7, %s1168
        %p1170 = scmp.lt.s32.totalorder %s23, 1
        %s1171 = scalar_select %p1170, %s23, 1
        %s1172 = smul.addr %s1171, 8
        %s1173 = scalar_lea.vmem %s8, %s1172
        // Predicated region
        $region53: #{tpu_custom_call.1} parent=47 // pred_check
          %p1174 = pneg %p198
        $region54: #{tpu_custom_call.1} parent=47 // pred_check_branch
          %1176 = sbr.rel (%p1174) target = $region56
        $region55: #{tpu_custom_call.1} parent=47 // pred_region
          _
        $region56: #{tpu_custom_call.1} parent=47 // pred_fallthru
          _
        // Predicated region
        $region57: #{tpu_custom_call.1} parent=47 // pred_check
          %p1177 = pneg %p224
        $region58: #{tpu_custom_call.1} parent=47 // pred_check_branch
          %1179 = sbr.rel (%p1177) target = $region60
        $region59: #{tpu_custom_call.1} parent=47 // pred_region
          _
        $region60: #{tpu_custom_call.1} parent=47 // pred_fallthru
          _
      $region48: #{tpu_custom_call.1} parent=5 // pred_fallthru
        _
      %p1180 = scmp.le.s32.totalorder 2, %s18
      // Predicated region
      $region61: #{tpu_custom_call.1} parent=5 // pred_check
        %p1181 = pneg %p1180
      $region62: #{tpu_custom_call.1} parent=5 // pred_check_branch
        %1183 = sbr.rel (%p1181) target = $region64
      $region63: #{tpu_custom_call.1} parent=5 // pred_region
        %s1184 = ssub.s32 %s18, 2
        // Predicated region
        $region65: #{tpu_custom_call.1} parent=63 // pred_check
          %p1185 = pneg %p204
        $region66: #{tpu_custom_call.1} parent=63 // pred_check_branch
          %1187 = sbr.rel (%p1185) target = $region68
        $region67: #{tpu_custom_call.1} parent=63 // pred_region
          %p1188 = scmp.lt.s32.totalorder %s24, 1
          %s1189 = scalar_select %p1188, %s24, 1
          %s1190 = smul.addr %s1189, 8
          %s1191 = scalar_lea.vmem %s7, %s1190
        $region68: #{tpu_custom_call.1} parent=63 // pred_fallthru
          _
        // Predicated region
        $region69: #{tpu_custom_call.1} parent=63 // pred_check
          %p1192 = pneg %p230
        $region70: #{tpu_custom_call.1} parent=63 // pred_check_branch
          %1194 = sbr.rel (%p1192) target = $region72
        $region71: #{tpu_custom_call.1} parent=63 // pred_region
          %p1195 = scmp.lt.s32.totalorder %s24, 1
          %s1196 = scalar_select %p1195, %s24, 1
          %s1197 = smul.addr %s1196, 8
          %s1198 = scalar_lea.vmem %s8, %s1197
        $region72: #{tpu_custom_call.1} parent=63 // pred_fallthru
          _
      $region64: #{tpu_custom_call.1} parent=5 // pred_fallthru
        _
    $region6: #{tpu_custom_call.1} parent=1 // loop_footer
      %s22 = sadd.s32 1, %s18
    $region7: #{tpu_custom_call.1} parent=1 // loop_footer_branch
      %17 = sbr.rel target = $region3
    $region8: #{tpu_custom_call.1} parent=1 // loop_exit
      _
    %1199 = vsyncpa [#allocation3], 1
    %s1200 = scalar_lea.sflag [#allocation3], 1
    %1201 = vsyncpa %s1200, 1

</llo_original>
